<compile_context>
chip_gen: v7x
topology: tpu7x:2x2x1
jax: 0.10.0
libtpu: 0.0.40
codegen_flags: <defaults>
</compile_context>

<pallas_src>
import functools

import jax
import jax.numpy as jnp
from jax.experimental import pallas as pl
from jax.experimental.pallas import tpu as pltpu


HIDDEN = 16
OUT = 2
DEFAULT_TILE_N = 2048  # rows per grid step; multiple of 128, sized for v7x VMEM


def _round_up(x, m):
    return ((x + m - 1) // m) * m


def _mlp_kernel(x_ref,
                w1_ref, b1_ref,
                w2_ref, b2_ref,
                w3_ref, b3_ref,
                w4_ref, b4_ref,
                o_ref):
    """One batch tile, transposed layout: batch on lanes.

    x_ref : (1, T)      w1: (H, 1)  b1: (H, 1)
    o_ref : (OUT, T)    w2,w3: (H, H)  b2,b3: (H, 1)
                        w4: (OUT, H)   b4: (OUT, 1)
    """
    x = x_ref[...]                                   # (1, T)

    # Layer 1: K=1 contraction -> VPU broadcast multiply-add (no MXU pass).
    h = jnp.tanh(w1_ref[...] * x + b1_ref[...])      # (H, T)

    # Layers 2 & 3: lane-dense (H, T) activations, f32 MXU accumulation.
    h = jnp.tanh(
        jnp.dot(w2_ref[...], h, preferred_element_type=jnp.float32)
        + b2_ref[...])                               # (H, T)
    h = jnp.tanh(
        jnp.dot(w3_ref[...], h, preferred_element_type=jnp.float32)
        + b3_ref[...])                               # (H, T)

    # Output projection: (OUT, H) @ (H, T) -> (OUT, T), lane-dense store.
    y = (jnp.dot(w4_ref[...], h, preferred_element_type=jnp.float32)
         + b4_ref[...])                              # (OUT, T)
    o_ref[...] = y.astype(o_ref.dtype)


@functools.partial(jax.jit, static_argnames=("tile_n",))
def net_forward(x, params, tile_n=DEFAULT_TILE_N):
    """x: (N, 1) float32 -> (N, 2) float32, matching torch Net.forward."""
    n = x.shape[0]
    w1, b1 = params["w1"], params["b1"]
    w2, b2 = params["w2"], params["b2"]
    w3, b3 = params["w3"], params["b3"]
    w4, b4 = params["w4"], params["b4"]

    # Transpose so batch lands on the lane (last) axis; pad N up to a
    # lane-aligned tile multiple.
    xt = x.astype(jnp.float32).T                     # (1, N)
    tile = min(tile_n, _round_up(n, 128))            # multiple of 128
    n_pad = _round_up(n, tile)
    if n_pad != n:
        xt = jnp.pad(xt, ((0, 0), (0, n_pad - n)))

    grid = (n_pad // tile,)

    # Weights/biases: full-array blocks with constant index_map -> resident
    # across the N grid (no per-tile re-DMA).
    resident = lambda a: pl.BlockSpec(a.shape, lambda i: (0,) * a.ndim)

    out_t = pl.pallas_call(
        _mlp_kernel,
        out_shape=jax.ShapeDtypeStruct((OUT, n_pad), jnp.float32),
        grid=grid,
        in_specs=[
            pl.BlockSpec((1, tile), lambda i: (0, i)),   # x tile, lanes = batch
            resident(w1), resident(b1),
            resident(w2), resident(b2),
            resident(w3), resident(b3),
            resident(w4), resident(b4),
        ],
        out_specs=pl.BlockSpec((OUT, tile), lambda i: (0, i)),
        compiler_params=pltpu.CompilerParams(
            dimension_semantics=("parallel",)),
    )(xt, w1, b1, w2, b2, w3, b3, w4, b4)

    # Back to the module's (N, 2) output convention; drop padding.
    return out_t[:, :n].T


def init_params(key, hidden=HIDDEN):
    """Torch-native shapes: Linear(in, out) has weight (out, in), bias (out,).

    Biases are stored as (out, 1) columns so they broadcast against the
    (out, TILE_N) transposed activations inside the kernel.
    """
    shapes = [(hidden, 1), (hidden, hidden), (hidden, hidden), (OUT, hidden)]
    params = {}
    keys = jax.random.split(key, 2 * len(shapes))
    for i, (fan_out, fan_in) in enumerate(shapes):
        bound = 1.0 / jnp.sqrt(fan_in)  # torch default U(-1/sqrt(in), 1/sqrt(in))
        w = jax.random.uniform(keys[2 * i], (fan_out, fan_in),
                               jnp.float32, -bound, bound)
        b = jax.random.uniform(keys[2 * i + 1], (fan_out, 1),
                               jnp.float32, -bound, bound)
        params[f"w{i + 1}"] = w
        params[f"b{i + 1}"] = b
    return params


def _reference_forward(x, params):
    """Pure-JAX reference using the same torch-native (out, in) weights."""
    h = jnp.tanh(x @ params["w1"].T + params["b1"].T)
    h = jnp.tanh(h @ params["w2"].T + params["b2"].T)
    h = jnp.tanh(h @ params["w3"].T + params["b3"].T)
    return h @ params["w4"].T + params["b4"].T


if __name__ == "__main__":
    key = jax.random.PRNGKey(0)
    pkey, xkey1, xkey2 = jax.random.split(key, 3)

    params = init_params(pkey)

    # Small batch (tests the lane-padding path: 8 -> 128).
    x_small = jax.random.uniform(xkey1, (8, 1), jnp.float32)
    out_small = jax.block_until_ready(net_forward(x_small, params))
    ref_small = _reference_forward(x_small, params)
    assert out_small.shape == (8, 2), out_small.shape
    assert jnp.allclose(out_small, ref_small, atol=1e-5, rtol=1e-5), \
        "mismatch vs reference (small batch)"

    # Non-multiple-of-128 batch (tests padding + tiling path).
    x_mid = jax.random.uniform(xkey2, (300, 1), jnp.float32)
    out_mid = jax.block_until_ready(net_forward(x_mid, params))
    ref_mid = _reference_forward(x_mid, params)
    assert out_mid.shape == (300, 2), out_mid.shape
    assert jnp.allclose(out_mid, ref_mid, atol=1e-5, rtol=1e-5), \
        "mismatch vs reference (padded batch)"

    print("KERNEL_OK")
</pallas_src>

<mosaic_0001>
module attributes {stable_mosaic.version = 11 : i64} {
  func.func @_mlp_kernel(%arg0: i32, %arg1: memref<1x128xf32, #tpu.memory_space<vmem>>, %arg2: memref<16x1xf32, #tpu.memory_space<vmem>>, %arg3: memref<16x1xf32, #tpu.memory_space<vmem>>, %arg4: memref<16x16xf32, #tpu.memory_space<vmem>>, %arg5: memref<16x1xf32, #tpu.memory_space<vmem>>, %arg6: memref<16x16xf32, #tpu.memory_space<vmem>>, %arg7: memref<16x1xf32, #tpu.memory_space<vmem>>, %arg8: memref<2x16xf32, #tpu.memory_space<vmem>>, %arg9: memref<2x1xf32, #tpu.memory_space<vmem>>, %arg10: memref<2x128xf32, #tpu.memory_space<vmem>>) attributes {dimension_semantics = [#tpu.dimension_semantics<parallel>], iteration_bounds = array<i64: 1>, scalar_prefetch = 0 : i64, scratch_operands = 0 : i64, tpu.core_type = #tpu.core_type<tc>, window_params = [{transform_indices = @transform_0, window_bounds = array<i64: 1, 128>}, {pipeline_mode = #tpu.pipeline_mode<synchronous>, transform_indices = @transform_1, window_bounds = array<i64: 16, 1>}, {pipeline_mode = #tpu.pipeline_mode<synchronous>, transform_indices = @transform_2, window_bounds = array<i64: 16, 1>}, {pipeline_mode = #tpu.pipeline_mode<synchronous>, transform_indices = @transform_3, window_bounds = array<i64: 16, 16>}, {pipeline_mode = #tpu.pipeline_mode<synchronous>, transform_indices = @transform_4, window_bounds = array<i64: 16, 1>}, {pipeline_mode = #tpu.pipeline_mode<synchronous>, transform_indices = @transform_5, window_bounds = array<i64: 16, 16>}, {pipeline_mode = #tpu.pipeline_mode<synchronous>, transform_indices = @transform_6, window_bounds = array<i64: 16, 1>}, {pipeline_mode = #tpu.pipeline_mode<synchronous>, transform_indices = @transform_7, window_bounds = array<i64: 2, 16>}, {pipeline_mode = #tpu.pipeline_mode<synchronous>, transform_indices = @transform_8, window_bounds = array<i64: 2, 1>}, {transform_indices = @transform_9, window_bounds = array<i64: 2, 128>}]} {
    %c0 = arith.constant 0 : index
    %c0_0 = arith.constant 0 : index
    %0 = vector.load %arg1[%c0, %c0_0] : memref<1x128xf32, #tpu.memory_space<vmem>>, vector<1x128xf32>
    %c0_1 = arith.constant 0 : index
    %c0_2 = arith.constant 0 : index
    %1 = vector.load %arg2[%c0_1, %c0_2] : memref<16x1xf32, #tpu.memory_space<vmem>>, vector<16x1xf32>
    %2 = vector.broadcast %1 : vector<16x1xf32> to vector<16x128xf32>
    %3 = vector.broadcast %0 : vector<1x128xf32> to vector<16x128xf32>
    %4 = arith.mulf %2, %3 : vector<16x128xf32>
    %c0_3 = arith.constant 0 : index
    %c0_4 = arith.constant 0 : index
    %5 = vector.load %arg3[%c0_3, %c0_4] : memref<16x1xf32, #tpu.memory_space<vmem>>, vector<16x1xf32>
    %6 = vector.broadcast %5 : vector<16x1xf32> to vector<16x128xf32>
    %7 = arith.addf %4, %6 : vector<16x128xf32>
    %8 = math.tanh %7 : vector<16x128xf32>
    %c0_5 = arith.constant 0 : index
    %c0_6 = arith.constant 0 : index
    %9 = vector.load %arg4[%c0_5, %c0_6] : memref<16x16xf32, #tpu.memory_space<vmem>>, vector<16x16xf32>
    %cst = arith.constant dense<0.000000e+00> : vector<16x128xf32>
    %10 = tpu.matmul %9, %8, %cst {dimension_numbers = #tpu.dot_dimension_numbers<[1], [0], [0], [1], [0, 0, 1, 1], [], []>} : vector<16x16xf32>, vector<16x128xf32>, vector<16x128xf32> -> vector<16x128xf32>
    %c0_7 = arith.constant 0 : index
    %c0_8 = arith.constant 0 : index
    %11 = vector.load %arg5[%c0_7, %c0_8] : memref<16x1xf32, #tpu.memory_space<vmem>>, vector<16x1xf32>
    %12 = vector.broadcast %11 : vector<16x1xf32> to vector<16x128xf32>
    %13 = arith.addf %10, %12 : vector<16x128xf32>
    %14 = math.tanh %13 : vector<16x128xf32>
    %c0_9 = arith.constant 0 : index
    %c0_10 = arith.constant 0 : index
    %15 = vector.load %arg6[%c0_9, %c0_10] : memref<16x16xf32, #tpu.memory_space<vmem>>, vector<16x16xf32>
    %cst_11 = arith.constant dense<0.000000e+00> : vector<16x128xf32>
    %16 = tpu.matmul %15, %14, %cst_11 {dimension_numbers = #tpu.dot_dimension_numbers<[1], [0], [0], [1], [0, 0, 1, 1], [], []>} : vector<16x16xf32>, vector<16x128xf32>, vector<16x128xf32> -> vector<16x128xf32>
    %c0_12 = arith.constant 0 : index
    %c0_13 = arith.constant 0 : index
    %17 = vector.load %arg7[%c0_12, %c0_13] : memref<16x1xf32, #tpu.memory_space<vmem>>, vector<16x1xf32>
    %18 = vector.broadcast %17 : vector<16x1xf32> to vector<16x128xf32>
    %19 = arith.addf %16, %18 : vector<16x128xf32>
    %20 = math.tanh %19 : vector<16x128xf32>
    %c0_14 = arith.constant 0 : index
    %c0_15 = arith.constant 0 : index
    %21 = vector.load %arg8[%c0_14, %c0_15] : memref<2x16xf32, #tpu.memory_space<vmem>>, vector<2x16xf32>
    %cst_16 = arith.constant dense<0.000000e+00> : vector<2x128xf32>
    %22 = tpu.matmul %21, %20, %cst_16 {dimension_numbers = #tpu.dot_dimension_numbers<[1], [0], [0], [1], [0, 0, 1, 1], [], []>} : vector<2x16xf32>, vector<16x128xf32>, vector<2x128xf32> -> vector<2x128xf32>
    %c0_17 = arith.constant 0 : index
    %c0_18 = arith.constant 0 : index
    %23 = vector.load %arg9[%c0_17, %c0_18] : memref<2x1xf32, #tpu.memory_space<vmem>>, vector<2x1xf32>
    %24 = vector.broadcast %23 : vector<2x1xf32> to vector<2x128xf32>
    %25 = arith.addf %22, %24 : vector<2x128xf32>
    %c0_19 = arith.constant 0 : index
    %c0_20 = arith.constant 0 : index
    %26 = vector.load %arg10[%c0_19, %c0_20] : memref<2x128xf32, #tpu.memory_space<vmem>>, vector<2x128xf32>
    tpu.vector_store %arg10[%c0_19, %c0_20], %25 {strides = array<i32>} : memref<2x128xf32, #tpu.memory_space<vmem>>, vector<2x128xf32>,
    return
  }
  func.func @transform_0(%arg0: i32) -> (i32, i32) {
    %c0_i32 = arith.constant 0 : i32
    %c0_i32_0 = arith.constant 0 : i32
    return %c0_i32, %arg0 : i32, i32
  }
  func.func @transform_1(%arg0: i32) -> (i32, i32) {
    %c0_i32 = arith.constant 0 : i32
    %c0_i32_0 = arith.constant 0 : i32
    %c0_i32_1 = arith.constant 0 : i32
    return %c0_i32, %c0_i32_0 : i32, i32
  }
  func.func @transform_2(%arg0: i32) -> (i32, i32) {
    %c0_i32 = arith.constant 0 : i32
    %c0_i32_0 = arith.constant 0 : i32
    %c0_i32_1 = arith.constant 0 : i32
    return %c0_i32, %c0_i32_0 : i32, i32
  }
  func.func @transform_3(%arg0: i32) -> (i32, i32) {
    %c0_i32 = arith.constant 0 : i32
    %c0_i32_0 = arith.constant 0 : i32
    %c0_i32_1 = arith.constant 0 : i32
    return %c0_i32, %c0_i32_0 : i32, i32
  }
  func.func @transform_4(%arg0: i32) -> (i32, i32) {
    %c0_i32 = arith.constant 0 : i32
    %c0_i32_0 = arith.constant 0 : i32
    %c0_i32_1 = arith.constant 0 : i32
    return %c0_i32, %c0_i32_0 : i32, i32
  }
  func.func @transform_5(%arg0: i32) -> (i32, i32) {
    %c0_i32 = arith.constant 0 : i32
    %c0_i32_0 = arith.constant 0 : i32
    %c0_i32_1 = arith.constant 0 : i32
    return %c0_i32, %c0_i32_0 : i32, i32
  }
  func.func @transform_6(%arg0: i32) -> (i32, i32) {
    %c0_i32 = arith.constant 0 : i32
    %c0_i32_0 = arith.constant 0 : i32
    %c0_i32_1 = arith.constant 0 : i32
    return %c0_i32, %c0_i32_0 : i32, i32
  }
  func.func @transform_7(%arg0: i32) -> (i32, i32) {
    %c0_i32 = arith.constant 0 : i32
    %c0_i32_0 = arith.constant 0 : i32
    %c0_i32_1 = arith.constant 0 : i32
    return %c0_i32, %c0_i32_0 : i32, i32
  }
  func.func @transform_8(%arg0: i32) -> (i32, i32) {
    %c0_i32 = arith.constant 0 : i32
    %c0_i32_0 = arith.constant 0 : i32
    %c0_i32_1 = arith.constant 0 : i32
    return %c0_i32, %c0_i32_0 : i32, i32
  }
  func.func @transform_9(%arg0: i32) -> (i32, i32) {
    %c0_i32 = arith.constant 0 : i32
    %c0_i32_0 = arith.constant 0 : i32
    return %c0_i32, %arg0 : i32, i32
  }
}

</mosaic_0001>

<llo_original>
// kernel: net_forward.1
$region0: #{net_forward.1}
  #allocation0 [shape = 'u32[]', space=smem, size = 0x4, offset = 0x4, fixed_abs, tag = 'smem constant byte address 0x4 - core index']
  #allocation1 [shape = 'u32[144,128]{1,0:T(1,128)}', space=vmem, size = 0x12000, scoped, tag = 'internal scratch']
  %s0 = inlined_call_operand.vmem [shape: f32[1,128], index: 0, kind: input, shape index: {}]
  %s1 = inlined_call_operand.vmem [shape: f32[16,1], index: 1, kind: input, shape index: {}]
  %s2 = inlined_call_operand.vmem [shape: f32[16,1], index: 2, kind: input, shape index: {}]
  %s3 = inlined_call_operand.vmem [shape: f32[16,16], index: 3, kind: input, shape index: {}]
  %s4 = inlined_call_operand.vmem [shape: f32[16,1], index: 4, kind: input, shape index: {}]
  %s5 = inlined_call_operand.vmem [shape: f32[16,16], index: 5, kind: input, shape index: {}]
  %s6 = inlined_call_operand.vmem [shape: f32[16,1], index: 6, kind: input, shape index: {}]
  %s7 = inlined_call_operand.vmem [shape: f32[2,16], index: 7, kind: input, shape index: {}]
  %s8 = inlined_call_operand.vmem [shape: f32[2,1], index: 8, kind: input, shape index: {}]
  %s9 = inlined_call_operand.vmem [shape: f32[2,128], index: 9, kind: output, shape index: {}]
  %s10 = sld [smem:[#allocation0]]
  $region46: #{net_forward.1} parent=0
    _
  %s12 = ssub.s32 1, %s10
  %s13 = scalar_select 0, %s12, %s10
  // Predicated region
  $region2: #{net_forward.1} parent=0 // pred_check
    _
  $region3: #{net_forward.1} parent=0 // pred_check_branch
    %15 = sbr.rel (0) target = $region5
  $region4: #{net_forward.1} parent=0 // pred_region
    _
  $region5: #{net_forward.1} parent=0 // pred_fallthru
    _
  // Predicated region
  $region6: #{net_forward.1} parent=0 // pred_check
    _
  $region7: #{net_forward.1} parent=0 // pred_check_branch
    %17 = sbr.rel (0) target = $region9
  $region8: #{net_forward.1} parent=0 // pred_region
    _
  $region9: #{net_forward.1} parent=0 // pred_fallthru
    _
  // Predicated region
  $region10: #{net_forward.1} parent=0 // pred_check
    _
  $region11: #{net_forward.1} parent=0 // pred_check_branch
    %19 = sbr.rel (0) target = $region13
  $region12: #{net_forward.1} parent=0 // pred_region
    _
  $region13: #{net_forward.1} parent=0 // pred_fallthru
    _
  // Predicated region
  $region14: #{net_forward.1} parent=0 // pred_check
    _
  $region15: #{net_forward.1} parent=0 // pred_check_branch
    %21 = sbr.rel (0) target = $region17
  $region16: #{net_forward.1} parent=0 // pred_region
    _
  $region17: #{net_forward.1} parent=0 // pred_fallthru
    _
  // Predicated region
  $region18: #{net_forward.1} parent=0 // pred_check
    _
  $region19: #{net_forward.1} parent=0 // pred_check_branch
    %23 = sbr.rel (0) target = $region21
  $region20: #{net_forward.1} parent=0 // pred_region
    _
  $region21: #{net_forward.1} parent=0 // pred_fallthru
    _
  // Predicated region
  $region22: #{net_forward.1} parent=0 // pred_check
    _
  $region23: #{net_forward.1} parent=0 // pred_check_branch
    %25 = sbr.rel (0) target = $region25
  $region24: #{net_forward.1} parent=0 // pred_region
    _
  $region25: #{net_forward.1} parent=0 // pred_fallthru
    _
  // Predicated region
  $region26: #{net_forward.1} parent=0 // pred_check
    _
  $region27: #{net_forward.1} parent=0 // pred_check_branch
    %27 = sbr.rel (0) target = $region29
  $region28: #{net_forward.1} parent=0 // pred_region
    _
  $region29: #{net_forward.1} parent=0 // pred_fallthru
    _
  // Predicated region
  $region30: #{net_forward.1} parent=0 // pred_check
    _
  $region31: #{net_forward.1} parent=0 // pred_check_branch
    %29 = sbr.rel (0) target = $region33
  $region32: #{net_forward.1} parent=0 // pred_region
    _
  $region33: #{net_forward.1} parent=0 // pred_fallthru
    _
  // Predicated region
  $region34: #{net_forward.1} parent=0 // pred_check
    _
  $region35: #{net_forward.1} parent=0 // pred_check_branch
    %31 = sbr.rel (0) target = $region37
  $region36: #{net_forward.1} parent=0 // pred_region
    _
  $region37: #{net_forward.1} parent=0 // pred_fallthru
    _
  %v32 = vld [vmem:[%s0] sm:$0x1]
  %v33 = vld [vmem:[%s1] sm:$0xff]
  %v34 = vld [vmem:[%s1 + $0x8] sm:$0xff]
  %36 = vset.pattern.permute.xlu0 0
  %37 = vperm.xlu0 %36, %v33
  %v38 = vpop.permute.xlu0 %37
  %41 = vset.pattern.permute.xlu0 0
  %42 = vperm.xlu0 %41, %v34
  %v43 = vpop.permute.xlu0 %42
  %v46 = vlaneseq
  %v47 = vshrl.u32 %v46, 7
  %v48 = vsub.s32 0, %v47
  %v49 = vrot.slane %v32, %v48
  %v51 = vmul.f32 %v38, %v49
  %v52 = vmul.f32 %v43, %v49
  %v53 = vld [vmem:[%s2] sm:$0xff]
  %v54 = vld [vmem:[%s2 + $0x8] sm:$0xff]
  %56 = vset.pattern.permute.xlu0 0
  %57 = vperm.xlu0 %56, %v53
  %v58 = vpop.permute.xlu0 %57
  %61 = vset.pattern.permute.xlu0 0
  %62 = vperm.xlu0 %61, %v54
  %v63 = vpop.permute.xlu0 %62
  %v65 = vadd.f32 %v51, %v58
  %v66 = vadd.f32 %v52, %v63
  %v67 = vtanh.pop %v65
  %v68 = vtanh.pop %v66
  %v69 = vld [vmem:[%s3] sm:$0xff]
  %v70 = vld [vmem:[%s3 + $0x8] sm:$0xff]
  %v71 = vld [vmem:[%s4] sm:$0xff]
  %v72 = vld [vmem:[%s4 + $0x8] sm:$0xff]
  %74 = vset.pattern.permute.xlu0 0
  %75 = vperm.xlu0 %74, %v71
  %v76 = vpop.permute.xlu0 %75
  %79 = vset.pattern.permute.xlu0 0
  %80 = vperm.xlu0 %79, %v72
  %v81 = vpop.permute.xlu0 %80
  %vm83 = vcmask 130048
  %v85 = vsel %vm83, %v69, 0
  %v88 = vsel %vm83, %v70, 0
  %90 = vmatprep.subr.mxu0 0.0
  %91 = vmatpush1.msra.mxu0 %v67
  %92 = vmatprep.subr.mxu0 0.0
  %93 = vmatpush1.msra.mxu0 %v68
  %94 = vmatprep.subr.mxu0 0.0
  %95 = vmatpush1.msra.mxu0 0.0
  %96 = vmatprep.subr.mxu0 0.0
  %97 = vmatpush1.msra.mxu0 0.0
  %98 = vmatprep.subr.mxu0 0.0
  %99 = vmatpush1.msra.mxu0 0.0
  %100 = vmatprep.subr.mxu0 0.0
  %101 = vmatpush1.msra.mxu0 0.0
  %102 = vmatprep.subr.mxu0 0.0
  %103 = vmatpush1.msra.mxu0 0.0
  %104 = vmatprep.subr.mxu0 0.0
  %105 = vmatpush1.msra.mxu0 0.0
  %106 = vmatprep.subr.mxu0 0.0
  %107 = vmatpush1.msra.mxu0 0.0
  %108 = vmatprep.subr.mxu0 0.0
  %109 = vmatpush1.msra.mxu0 0.0
  %110 = vmatprep.subr.mxu0 0.0
  %111 = vmatpush1.msra.mxu0 0.0
  %112 = vmatprep.subr.mxu0 0.0
  %113 = vmatpush1.msra.mxu0 0.0
  %114 = vmatprep.subr.mxu0 0.0
  %115 = vmatpush1.msra.mxu0 0.0
  %116 = vmatprep.subr.mxu0 0.0
  %117 = vmatpush1.msra.mxu0 0.0
  %118 = vmatprep.subr.mxu0 0.0
  %119 = vmatpush1.msra.mxu0 0.0
  %120 = vmatprep.subr.mxu0 0.0
  %121 = vmatpush1.msra.mxu0 0.0
  %122 = vmatprep.subr.mxu0 0.0
  %123 = vmatpush1.msra.mxu0 0.0
  %124 = vmatprep.subr.mxu0 0.0
  %125 = vmatpush1.msra.mxu0 0.0
  %126 = vmatprep.subr.mxu0 0.0
  %127 = vmatpush1.msra.mxu0 0.0
  %128 = vmatprep.subr.mxu0 0.0
  %129 = vmatpush1.msra.mxu0 0.0
  %130 = vmatprep.subr.mxu0 0.0
  %131 = vmatpush1.msra.mxu0 0.0
  %132 = vmatprep.subr.mxu0 0.0
  %133 = vmatpush1.msra.mxu0 0.0
  %134 = vmatprep.subr.mxu0 0.0
  %135 = vmatpush1.msra.mxu0 0.0
  %136 = vmatprep.subr.mxu0 0.0
  %137 = vmatpush1.msra.mxu0 0.0
  %138 = vmatprep.subr.mxu0 0.0
  %139 = vmatpush1.msra.mxu0 0.0
  %140 = vmatprep.subr.mxu0 0.0
  %141 = vmatpush1.msra.mxu0 0.0
  %142 = vmatprep.subr.mxu0 0.0
  %143 = vmatpush1.msra.mxu0 0.0
  %144 = vmatprep.subr.mxu0 0.0
  %145 = vmatpush1.msra.mxu0 0.0
  %146 = vmatprep.subr.mxu0 0.0
  %147 = vmatpush1.msra.mxu0 0.0
  %148 = vmatprep.subr.mxu0 0.0
  %149 = vmatpush1.msra.mxu0 0.0
  %150 = vmatprep.subr.mxu0 0.0
  %151 = vmatpush1.msra.mxu0 0.0
  %152 = vmatprep.subr.mxu0 0.0
  %153 = vmatpush1.msra.mxu0 0.0
  %154 = vmatprep.mubr.f32.mxu0 0.0
  %155 = vmatmul.mubr.f32.gmra.mrb[0].mxu0 %v85
  %v156 = vpop.f32.mrb[0].mxu0
  %v157 = vadd.f32 %v76, %v156
  %v158 = vpop.f32.mrb[0].mxu0
  %159 = vmatprep.mubr.f32.mxu0 0.0
  %160 = vmatmul.mubr.f32.gmra.mrb[0].mxu0 %v88
  %v161 = vpop.f32.mrb[0].mxu0
  %v162 = vadd.f32 %v81, %v161
  %v163 = vpop.f32.mrb[0].mxu0
  %164 = vdwg.mxu0
  %v165 = vtanh.pop %v157
  %v166 = vtanh.pop %v162
  %v167 = vld [vmem:[%s5] sm:$0xff]
  %v168 = vld [vmem:[%s5 + $0x8] sm:$0xff]
  %v169 = vld [vmem:[%s6] sm:$0xff]
  %v170 = vld [vmem:[%s6 + $0x8] sm:$0xff]
  %172 = vset.pattern.permute.xlu0 0
  %173 = vperm.xlu0 %172, %v169
  %v174 = vpop.permute.xlu0 %173
  %177 = vset.pattern.permute.xlu0 0
  %178 = vperm.xlu0 %177, %v170
  %v179 = vpop.permute.xlu0 %178
  %v182 = vsel %vm83, %v167, 0
  %v185 = vsel %vm83, %v168, 0
  %187 = vmatprep.subr.mxu0 0.0
  %188 = vmatpush1.msra.mxu0 %v165
  %189 = vmatprep.subr.mxu0 0.0
  %190 = vmatpush1.msra.mxu0 %v166
  %191 = vmatprep.subr.mxu0 0.0
  %192 = vmatpush1.msra.mxu0 0.0
  %193 = vmatprep.subr.mxu0 0.0
  %194 = vmatpush1.msra.mxu0 0.0
  %195 = vmatprep.subr.mxu0 0.0
  %196 = vmatpush1.msra.mxu0 0.0
  %197 = vmatprep.subr.mxu0 0.0
  %198 = vmatpush1.msra.mxu0 0.0
  %199 = vmatprep.subr.mxu0 0.0
  %200 = vmatpush1.msra.mxu0 0.0
  %201 = vmatprep.subr.mxu0 0.0
  %202 = vmatpush1.msra.mxu0 0.0
  %203 = vmatprep.subr.mxu0 0.0
  %204 = vmatpush1.msra.mxu0 0.0
  %205 = vmatprep.subr.mxu0 0.0
  %206 = vmatpush1.msra.mxu0 0.0
  %207 = vmatprep.subr.mxu0 0.0
  %208 = vmatpush1.msra.mxu0 0.0
  %209 = vmatprep.subr.mxu0 0.0
  %210 = vmatpush1.msra.mxu0 0.0
  %211 = vmatprep.subr.mxu0 0.0
  %212 = vmatpush1.msra.mxu0 0.0
  %213 = vmatprep.subr.mxu0 0.0
  %214 = vmatpush1.msra.mxu0 0.0
  %215 = vmatprep.subr.mxu0 0.0
  %216 = vmatpush1.msra.mxu0 0.0
  %217 = vmatprep.subr.mxu0 0.0
  %218 = vmatpush1.msra.mxu0 0.0
  %219 = vmatprep.subr.mxu0 0.0
  %220 = vmatpush1.msra.mxu0 0.0
  %221 = vmatprep.subr.mxu0 0.0
  %222 = vmatpush1.msra.mxu0 0.0
  %223 = vmatprep.subr.mxu0 0.0
  %224 = vmatpush1.msra.mxu0 0.0
  %225 = vmatprep.subr.mxu0 0.0
  %226 = vmatpush1.msra.mxu0 0.0
  %227 = vmatprep.subr.mxu0 0.0
  %228 = vmatpush1.msra.mxu0 0.0
  %229 = vmatprep.subr.mxu0 0.0
  %230 = vmatpush1.msra.mxu0 0.0
  %231 = vmatprep.subr.mxu0 0.0
  %232 = vmatpush1.msra.mxu0 0.0
  %233 = vmatprep.subr.mxu0 0.0
  %234 = vmatpush1.msra.mxu0 0.0
  %235 = vmatprep.subr.mxu0 0.0
  %236 = vmatpush1.msra.mxu0 0.0
  %237 = vmatprep.subr.mxu0 0.0
  %238 = vmatpush1.msra.mxu0 0.0
  %239 = vmatprep.subr.mxu0 0.0
  %240 = vmatpush1.msra.mxu0 0.0
  %241 = vmatprep.subr.mxu0 0.0
  %242 = vmatpush1.msra.mxu0 0.0
  %243 = vmatprep.subr.mxu0 0.0
  %244 = vmatpush1.msra.mxu0 0.0
  %245 = vmatprep.subr.mxu0 0.0
  %246 = vmatpush1.msra.mxu0 0.0
  %247 = vmatprep.subr.mxu0 0.0
  %248 = vmatpush1.msra.mxu0 0.0
  %249 = vmatprep.subr.mxu0 0.0
  %250 = vmatpush1.msra.mxu0 0.0
  %251 = vmatprep.mubr.f32.mxu0 0.0
  %252 = vmatmul.mubr.f32.gmra.mrb[0].mxu0 %v182
  %v253 = vpop.f32.mrb[0].mxu0
  %v254 = vadd.f32 %v174, %v253
  %v255 = vpop.f32.mrb[0].mxu0
  %256 = vmatprep.mubr.f32.mxu0 0.0
  %257 = vmatmul.mubr.f32.gmra.mrb[0].mxu0 %v185
  %v258 = vpop.f32.mrb[0].mxu0
  %v259 = vadd.f32 %v179, %v258
  %v260 = vpop.f32.mrb[0].mxu0
  %261 = vdwg.mxu0
  %v262 = vtanh.pop %v254
  %v263 = vtanh.pop %v259
  %v264 = vld [vmem:[%s7] sm:$0x3]
  %v265 = vld [vmem:[%s8] sm:$0x3]
  %267 = vset.pattern.permute.xlu0 0
  %268 = vperm.xlu0 %267, %v265
  %v269 = vpop.permute.xlu0 %268
  %v272 = vsel %vm83, %v264, 0
  %274 = vmatprep.subr.mxu0 0.0
  %275 = vmatpush1.msra.mxu0 %v262
  %276 = vmatprep.subr.mxu0 0.0
  %277 = vmatpush1.msra.mxu0 %v263
  %278 = vmatprep.subr.mxu0 0.0
  %279 = vmatpush1.msra.mxu0 0.0
  %280 = vmatprep.subr.mxu0 0.0
  %281 = vmatpush1.msra.mxu0 0.0
  %282 = vmatprep.subr.mxu0 0.0
  %283 = vmatpush1.msra.mxu0 0.0
  %284 = vmatprep.subr.mxu0 0.0
  %285 = vmatpush1.msra.mxu0 0.0
  %286 = vmatprep.subr.mxu0 0.0
  %287 = vmatpush1.msra.mxu0 0.0
  %288 = vmatprep.subr.mxu0 0.0
  %289 = vmatpush1.msra.mxu0 0.0
  %290 = vmatprep.subr.mxu0 0.0
  %291 = vmatpush1.msra.mxu0 0.0
  %292 = vmatprep.subr.mxu0 0.0
  %293 = vmatpush1.msra.mxu0 0.0
  %294 = vmatprep.subr.mxu0 0.0
  %295 = vmatpush1.msra.mxu0 0.0
  %296 = vmatprep.subr.mxu0 0.0
  %297 = vmatpush1.msra.mxu0 0.0
  %298 = vmatprep.subr.mxu0 0.0
  %299 = vmatpush1.msra.mxu0 0.0
  %300 = vmatprep.subr.mxu0 0.0
  %301 = vmatpush1.msra.mxu0 0.0
  %302 = vmatprep.subr.mxu0 0.0
  %303 = vmatpush1.msra.mxu0 0.0
  %304 = vmatprep.subr.mxu0 0.0
  %305 = vmatpush1.msra.mxu0 0.0
  %306 = vmatprep.subr.mxu0 0.0
  %307 = vmatpush1.msra.mxu0 0.0
  %308 = vmatprep.subr.mxu0 0.0
  %309 = vmatpush1.msra.mxu0 0.0
  %310 = vmatprep.subr.mxu0 0.0
  %311 = vmatpush1.msra.mxu0 0.0
  %312 = vmatprep.subr.mxu0 0.0
  %313 = vmatpush1.msra.mxu0 0.0
  %314 = vmatprep.subr.mxu0 0.0
  %315 = vmatpush1.msra.mxu0 0.0
  %316 = vmatprep.subr.mxu0 0.0
  %317 = vmatpush1.msra.mxu0 0.0
  %318 = vmatprep.subr.mxu0 0.0
  %319 = vmatpush1.msra.mxu0 0.0
  %320 = vmatprep.subr.mxu0 0.0
  %321 = vmatpush1.msra.mxu0 0.0
  %322 = vmatprep.subr.mxu0 0.0
  %323 = vmatpush1.msra.mxu0 0.0
  %324 = vmatprep.subr.mxu0 0.0
  %325 = vmatpush1.msra.mxu0 0.0
  %326 = vmatprep.subr.mxu0 0.0
  %327 = vmatpush1.msra.mxu0 0.0
  %328 = vmatprep.subr.mxu0 0.0
  %329 = vmatpush1.msra.mxu0 0.0
  %330 = vmatprep.subr.mxu0 0.0
  %331 = vmatpush1.msra.mxu0 0.0
  %332 = vmatprep.subr.mxu0 0.0
  %333 = vmatpush1.msra.mxu0 0.0
  %334 = vmatprep.subr.mxu0 0.0
  %335 = vmatpush1.msra.mxu0 0.0
  %336 = vmatprep.subr.mxu0 0.0
  %337 = vmatpush1.msra.mxu0 0.0
  %338 = vmatprep.mubr.f32.mxu0 0.0
  %339 = vmatmul.mubr.f32.gmra.mrb[0].mxu0 %v272
  %v340 = vpop.f32.mrb[0].mxu0
  %v341 = vadd.f32 %v269, %v340
  %v342 = vpop.f32.mrb[0].mxu0
  %343 = vdwg.mxu0
  %344 = vst [vmem:[%s9] sm:$0x3] %v341
  // Predicated region
  $region38: #{net_forward.1} parent=0 // pred_check
    _
  $region39: #{net_forward.1} parent=0 // pred_check_branch
    %346 = sbr.rel (0) target = $region41
  $region40: #{net_forward.1} parent=0 // pred_region
    _
  $region41: #{net_forward.1} parent=0 // pred_fallthru
    _
  // Predicated region
  $region42: #{net_forward.1} parent=0 // pred_check
    _
  $region43: #{net_forward.1} parent=0 // pred_check_branch
    %348 = sbr.rel (0) target = $region45
  $region44: #{net_forward.1} parent=0 // pred_region
    _
  $region45: #{net_forward.1} parent=0 // pred_fallthru
    _

</llo_original>
